<compile_context>
chip_gen: v7x
topology: tpu7x:2x2x1
jax: 0.10.0
libtpu: 0.0.40
codegen_flags: <defaults>
</compile_context>

<pallas_src>
import functools

import jax
import jax.numpy as jnp
from jax import lax
from jax.experimental import pallas as pl
from jax.experimental.pallas import tpu as pltpu

D_IN, D_H1, D_H2, D_OUT = 5, 8, 4, 12


def _mlp_kernel(x_ref, w1_ref, b1_ref, w2_ref, b2_ref, w3_ref, b3_ref, o_ref):
    # Natural [batch, feature] orientation end to end (no transposes anywhere).
    #   x_ref: [tile, 5], w*: [fin, fout], b*: [1, fout], o_ref: [tile, 12]
    x = x_ref[...]

    h1 = jnp.dot(x, w1_ref[...], preferred_element_type=jnp.float32,
                 precision=lax.Precision.HIGHEST)
    h1 = jnp.maximum(h1 + b1_ref[...], 0.0)

    h2 = jnp.dot(h1, w2_ref[...], preferred_element_type=jnp.float32,
                 precision=lax.Precision.HIGHEST)
    h2 = jnp.maximum(h2 + b2_ref[...], 0.0)

    h3 = jnp.dot(h2, w3_ref[...], preferred_element_type=jnp.float32,
                 precision=lax.Precision.HIGHEST)
    h3 = jnp.maximum(h3 + b3_ref[...], 0.0)

    o_ref[...] = h3.astype(o_ref.dtype)


def _round_up(n, m):
    return ((n + m - 1) // m) * m


def _choose_tile(batch, tile_b):
    """Pick the batch (sublane) tile.

    Features are full-dim blocks, so the only constraint is tile % 8 == 0 or
    tile == batch.  Keep >= 2 grid steps for large batches so v7x's second
    TensorCore gets work on the "parallel" axis.
    """
    tile_b = max(8, (tile_b // 8) * 8)  # robustness: force a multiple of 8
    if batch > tile_b:
        return tile_b                    # many tiles; last one may be ragged
    if batch > 2048:
        return _round_up(pl.cdiv(batch, 2), 8)   # 2 tiles -> both v7x cores
    return batch                         # single exact (full-dim) tile


@functools.partial(jax.jit, static_argnames=("tile_b",))
def simple_model_forward(x, params, tile_b=4096):
    """x: [batch, 5] float32 -> [batch, 12] float32.

    params: w_i stored as [fin, fout] (PyTorch weight.T), b_i as [1, fout].
    """
    w1, b1 = params["w1"], params["b1"]
    w2, b2 = params["w2"], params["b2"]
    w3, b3 = params["w3"], params["b3"]

    batch = x.shape[0]
    tile = _choose_tile(batch, tile_b)
    n_tiles = pl.cdiv(batch, tile)

    # Constant-index full-shape blocks: weights/biases stay resident in VMEM
    # across all grid steps (no per-step re-DMA).
    const = lambda a: pl.BlockSpec(a.shape, lambda i: (0, 0))

    cost = pl.CostEstimate(
        flops=2 * (D_IN * D_H1 + D_H1 * D_H2 + D_H2 * D_OUT) * batch,
        transcendentals=0,
        bytes_accessed=(D_IN + D_OUT) * 4 * batch,
    )

    out = pl.pallas_call(
        _mlp_kernel,
        out_shape=jax.ShapeDtypeStruct((batch, D_OUT), jnp.float32),
        grid=(n_tiles,),
        in_specs=[
            pl.BlockSpec((tile, D_IN), lambda i: (i, 0)),   # x walks the batch axis
            const(w1), const(b1),
            const(w2), const(b2),
            const(w3), const(b3),
        ],
        out_specs=pl.BlockSpec((tile, D_OUT), lambda i: (i, 0)),
        compiler_params=pltpu.CompilerParams(
            dimension_semantics=("parallel",),
            vmem_limit_bytes=32 * 1024 * 1024,
        ),
        cost_estimate=cost,
    )(x, w1, b1, w2, b2, w3, b3)
    return out


def init_params(key):
    """Deterministic init matching PyTorch nn.Linear defaults.

    Weights are stored [in_features, out_features] (i.e. PyTorch weight.T) so
    the kernel needs no transposes; biases as [1, out_features]."""
    dims = [(D_IN, D_H1), (D_H1, D_H2), (D_H2, D_OUT)]
    params = {}
    for i, (fin, fout) in enumerate(dims, start=1):
        key, kw, kb = jax.random.split(key, 3)
        bound = 1.0 / jnp.sqrt(fin)  # U(-1/sqrt(fan_in), +1/sqrt(fan_in))
        params[f"w{i}"] = jax.random.uniform(
            kw, (fin, fout), jnp.float32, -bound, bound)
        params[f"b{i}"] = jax.random.uniform(
            kb, (1, fout), jnp.float32, -bound, bound)
    return params


def reference_forward(x, params):
    p = lax.Precision.HIGHEST
    h = jnp.maximum(jnp.dot(x, params["w1"], precision=p) + params["b1"], 0.0)
    h = jnp.maximum(jnp.dot(h, params["w2"], precision=p) + params["b2"], 0.0)
    h = jnp.maximum(jnp.dot(h, params["w3"], precision=p) + params["b3"], 0.0)
    return h


if __name__ == "__main__":
    key = jax.random.PRNGKey(0)
    key, kx = jax.random.split(key)
    params = init_params(key)

    # Small canonical run (matches the tiny shapes used by the PyTorch test).
    batch = 8
    x = jax.random.normal(kx, (batch, D_IN), jnp.float32)
    out = simple_model_forward(x, params)
    jax.block_until_ready(out)
    ref = reference_forward(x, params)
    assert out.shape == (batch, D_OUT), out.shape
    assert jnp.allclose(out, ref, atol=1e-5, rtol=1e-5), "mismatch vs reference"

    # Exercise the multi-tile + ragged-last-tile path too (small tile_b).
    key, kx2 = jax.random.split(key)
    x2 = jax.random.normal(kx2, (300, D_IN), jnp.float32)
    out2 = simple_model_forward(x2, params, tile_b=128)
    jax.block_until_ready(out2)
    ref2 = reference_forward(x2, params)
    assert out2.shape == (300, D_OUT), out2.shape
    assert jnp.allclose(out2, ref2, atol=1e-5, rtol=1e-5), "mismatch (tiled path)"

    print("KERNEL_OK")
</pallas_src>

<mosaic_0001>
module attributes {stable_mosaic.version = 11 : i64} {
  func.func @_mlp_kernel(%arg0: i32, %arg1: memref<8x5xf32, #tpu.memory_space<vmem>>, %arg2: memref<5x8xf32, #tpu.memory_space<vmem>>, %arg3: memref<1x8xf32, #tpu.memory_space<vmem>>, %arg4: memref<8x4xf32, #tpu.memory_space<vmem>>, %arg5: memref<1x4xf32, #tpu.memory_space<vmem>>, %arg6: memref<4x12xf32, #tpu.memory_space<vmem>>, %arg7: memref<1x12xf32, #tpu.memory_space<vmem>>, %arg8: memref<8x12xf32, #tpu.memory_space<vmem>>) attributes {dimension_semantics = [#tpu.dimension_semantics<parallel>], iteration_bounds = array<i64: 1>, scalar_prefetch = 0 : i64, scratch_operands = 0 : i64, tpu.core_type = #tpu.core_type<tc>, window_params = [{transform_indices = @transform_0, window_bounds = array<i64: 8, 5>}, {pipeline_mode = #tpu.pipeline_mode<synchronous>, transform_indices = @transform_1, window_bounds = array<i64: 5, 8>}, {pipeline_mode = #tpu.pipeline_mode<synchronous>, transform_indices = @transform_2, window_bounds = array<i64: 1, 8>}, {pipeline_mode = #tpu.pipeline_mode<synchronous>, transform_indices = @transform_3, window_bounds = array<i64: 8, 4>}, {pipeline_mode = #tpu.pipeline_mode<synchronous>, transform_indices = @transform_4, window_bounds = array<i64: 1, 4>}, {pipeline_mode = #tpu.pipeline_mode<synchronous>, transform_indices = @transform_5, window_bounds = array<i64: 4, 12>}, {pipeline_mode = #tpu.pipeline_mode<synchronous>, transform_indices = @transform_6, window_bounds = array<i64: 1, 12>}, {transform_indices = @transform_7, window_bounds = array<i64: 8, 12>}]} {
    %c0 = arith.constant 0 : index
    %c0_0 = arith.constant 0 : index
    %0 = vector.load %arg1[%c0, %c0_0] : memref<8x5xf32, #tpu.memory_space<vmem>>, vector<8x5xf32>
    %c0_1 = arith.constant 0 : index
    %c0_2 = arith.constant 0 : index
    %1 = vector.load %arg2[%c0_1, %c0_2] : memref<5x8xf32, #tpu.memory_space<vmem>>, vector<5x8xf32>
    %cst = arith.constant dense<0.000000e+00> : vector<8x8xf32>
    %2 = tpu.matmul %0, %1, %cst {dimension_numbers = #tpu.dot_dimension_numbers<[1], [0], [0], [1], [0, 0, 1, 1], [], []>, precision = #tpu.contract_precision<fp32>} : vector<8x5xf32>, vector<5x8xf32>, vector<8x8xf32> -> vector<8x8xf32>
    %c0_3 = arith.constant 0 : index
    %c0_4 = arith.constant 0 : index
    %3 = vector.load %arg3[%c0_3, %c0_4] : memref<1x8xf32, #tpu.memory_space<vmem>>, vector<1x8xf32>
    %4 = vector.broadcast %3 : vector<1x8xf32> to vector<8x8xf32>
    %5 = arith.addf %2, %4 : vector<8x8xf32>
    %cst_5 = arith.constant 0.000000e+00 : f32
    %6 = vector.broadcast %cst_5 : f32 to vector<8x8xf32>
    %7 = arith.maximumf %5, %6 : vector<8x8xf32>
    %c0_6 = arith.constant 0 : index
    %c0_7 = arith.constant 0 : index
    %8 = vector.load %arg4[%c0_6, %c0_7] : memref<8x4xf32, #tpu.memory_space<vmem>>, vector<8x4xf32>
    %cst_8 = arith.constant dense<0.000000e+00> : vector<8x4xf32>
    %9 = tpu.matmul %7, %8, %cst_8 {dimension_numbers = #tpu.dot_dimension_numbers<[1], [0], [0], [1], [0, 0, 1, 1], [], []>, precision = #tpu.contract_precision<fp32>} : vector<8x8xf32>, vector<8x4xf32>, vector<8x4xf32> -> vector<8x4xf32>
    %c0_9 = arith.constant 0 : index
    %c0_10 = arith.constant 0 : index
    %10 = vector.load %arg5[%c0_9, %c0_10] : memref<1x4xf32, #tpu.memory_space<vmem>>, vector<1x4xf32>
    %11 = vector.broadcast %10 : vector<1x4xf32> to vector<8x4xf32>
    %12 = arith.addf %9, %11 : vector<8x4xf32>
    %cst_11 = arith.constant 0.000000e+00 : f32
    %13 = vector.broadcast %cst_11 : f32 to vector<8x4xf32>
    %14 = arith.maximumf %12, %13 : vector<8x4xf32>
    %c0_12 = arith.constant 0 : index
    %c0_13 = arith.constant 0 : index
    %15 = vector.load %arg6[%c0_12, %c0_13] : memref<4x12xf32, #tpu.memory_space<vmem>>, vector<4x12xf32>
    %cst_14 = arith.constant dense<0.000000e+00> : vector<8x12xf32>
    %16 = tpu.matmul %14, %15, %cst_14 {dimension_numbers = #tpu.dot_dimension_numbers<[1], [0], [0], [1], [0, 0, 1, 1], [], []>, precision = #tpu.contract_precision<fp32>} : vector<8x4xf32>, vector<4x12xf32>, vector<8x12xf32> -> vector<8x12xf32>
    %c0_15 = arith.constant 0 : index
    %c0_16 = arith.constant 0 : index
    %17 = vector.load %arg7[%c0_15, %c0_16] : memref<1x12xf32, #tpu.memory_space<vmem>>, vector<1x12xf32>
    %18 = vector.broadcast %17 : vector<1x12xf32> to vector<8x12xf32>
    %19 = arith.addf %16, %18 : vector<8x12xf32>
    %cst_17 = arith.constant 0.000000e+00 : f32
    %20 = vector.broadcast %cst_17 : f32 to vector<8x12xf32>
    %21 = arith.maximumf %19, %20 : vector<8x12xf32>
    %c0_18 = arith.constant 0 : index
    %c0_19 = arith.constant 0 : index
    %22 = vector.load %arg8[%c0_18, %c0_19] : memref<8x12xf32, #tpu.memory_space<vmem>>, vector<8x12xf32>
    tpu.vector_store %arg8[%c0_18, %c0_19], %21 {strides = array<i32>} : memref<8x12xf32, #tpu.memory_space<vmem>>, vector<8x12xf32>,
    return
  }
  func.func @transform_0(%arg0: i32) -> (i32, i32) {
    %c0_i32 = arith.constant 0 : i32
    %c0_i32_0 = arith.constant 0 : i32
    return %arg0, %c0_i32 : i32, i32
  }
  func.func @transform_1(%arg0: i32) -> (i32, i32) {
    %c0_i32 = arith.constant 0 : i32
    %c0_i32_0 = arith.constant 0 : i32
    %c0_i32_1 = arith.constant 0 : i32
    return %c0_i32, %c0_i32_0 : i32, i32
  }
  func.func @transform_2(%arg0: i32) -> (i32, i32) {
    %c0_i32 = arith.constant 0 : i32
    %c0_i32_0 = arith.constant 0 : i32
    %c0_i32_1 = arith.constant 0 : i32
    return %c0_i32, %c0_i32_0 : i32, i32
  }
  func.func @transform_3(%arg0: i32) -> (i32, i32) {
    %c0_i32 = arith.constant 0 : i32
    %c0_i32_0 = arith.constant 0 : i32
    %c0_i32_1 = arith.constant 0 : i32
    return %c0_i32, %c0_i32_0 : i32, i32
  }
  func.func @transform_4(%arg0: i32) -> (i32, i32) {
    %c0_i32 = arith.constant 0 : i32
    %c0_i32_0 = arith.constant 0 : i32
    %c0_i32_1 = arith.constant 0 : i32
    return %c0_i32, %c0_i32_0 : i32, i32
  }
  func.func @transform_5(%arg0: i32) -> (i32, i32) {
    %c0_i32 = arith.constant 0 : i32
    %c0_i32_0 = arith.constant 0 : i32
    %c0_i32_1 = arith.constant 0 : i32
    return %c0_i32, %c0_i32_0 : i32, i32
  }
  func.func @transform_6(%arg0: i32) -> (i32, i32) {
    %c0_i32 = arith.constant 0 : i32
    %c0_i32_0 = arith.constant 0 : i32
    %c0_i32_1 = arith.constant 0 : i32
    return %c0_i32, %c0_i32_0 : i32, i32
  }
  func.func @transform_7(%arg0: i32) -> (i32, i32) {
    %c0_i32 = arith.constant 0 : i32
    %c0_i32_0 = arith.constant 0 : i32
    return %arg0, %c0_i32 : i32, i32
  }
}

</mosaic_0001>

<llo_original>
// kernel: simple_model_forward.1
$region0: #{simple_model_forward.1}
  #allocation0 [shape = 'u32[]', space=smem, size = 0x4, offset = 0x4, fixed_abs, tag = 'smem constant byte address 0x4 - core index']
  #allocation1 [shape = 'u32[144,128]{1,0:T(1,128)}', space=vmem, size = 0x12000, scoped, tag = 'internal scratch']
  %s0 = inlined_call_operand.vmem [shape: f32[8,5], index: 0, kind: input, shape index: {}]
  %s1 = inlined_call_operand.vmem [shape: f32[5,8], index: 1, kind: input, shape index: {}]
  %s2 = inlined_call_operand.vmem [shape: f32[1,8], index: 2, kind: input, shape index: {}]
  %s3 = inlined_call_operand.vmem [shape: f32[8,4], index: 3, kind: input, shape index: {}]
  %s4 = inlined_call_operand.vmem [shape: f32[1,4], index: 4, kind: input, shape index: {}]
  %s5 = inlined_call_operand.vmem [shape: f32[4,12], index: 5, kind: input, shape index: {}]
  %s6 = inlined_call_operand.vmem [shape: f32[1,12], index: 6, kind: input, shape index: {}]
  %s7 = inlined_call_operand.hbm [shape: f32[8,12], index: 7, kind: output, shape index: {}]
  %s8 = sld [smem:[#allocation0]]
  $region38: #{simple_model_forward.1} parent=0
    _
  %s10 = ssub.s32 1, %s8
  %s11 = scalar_select 0, %s10, %s8
  $region1: #{simple_model_forward.1} parent=0
    #allocation2 [shape = 'u8[4096]{0}', space=vmem, size = 0x1000, scoped, tag = 'output window, operand 0, single buffered']
    #allocation3 [shape = 's32[1]{0}', space=sflag, size = 0x4, scoped, tag = 'scoped memory for simple_model_forward.1']
    %12 = vsyncpa [#allocation3], 0
    // Predicated region
    $region2: #{simple_model_forward.1} parent=1 // pred_check
      _
    $region3: #{simple_model_forward.1} parent=1 // pred_check_branch
      %14 = sbr.rel (0) target = $region5
    $region4: #{simple_model_forward.1} parent=1 // pred_region
      _
    $region5: #{simple_model_forward.1} parent=1 // pred_fallthru
      _
    // Predicated region
    $region6: #{simple_model_forward.1} parent=1 // pred_check
      _
    $region7: #{simple_model_forward.1} parent=1 // pred_check_branch
      %16 = sbr.rel (0) target = $region9
    $region8: #{simple_model_forward.1} parent=1 // pred_region
      _
    $region9: #{simple_model_forward.1} parent=1 // pred_fallthru
      _
    // Predicated region
    $region10: #{simple_model_forward.1} parent=1 // pred_check
      _
    $region11: #{simple_model_forward.1} parent=1 // pred_check_branch
      %18 = sbr.rel (0) target = $region13
    $region12: #{simple_model_forward.1} parent=1 // pred_region
      _
    $region13: #{simple_model_forward.1} parent=1 // pred_fallthru
      _
    // Predicated region
    $region14: #{simple_model_forward.1} parent=1 // pred_check
      _
    $region15: #{simple_model_forward.1} parent=1 // pred_check_branch
      %20 = sbr.rel (0) target = $region17
    $region16: #{simple_model_forward.1} parent=1 // pred_region
      _
    $region17: #{simple_model_forward.1} parent=1 // pred_fallthru
      _
    // Predicated region
    $region18: #{simple_model_forward.1} parent=1 // pred_check
      _
    $region19: #{simple_model_forward.1} parent=1 // pred_check_branch
      %22 = sbr.rel (0) target = $region21
    $region20: #{simple_model_forward.1} parent=1 // pred_region
      _
    $region21: #{simple_model_forward.1} parent=1 // pred_fallthru
      _
    // Predicated region
    $region22: #{simple_model_forward.1} parent=1 // pred_check
      _
    $region23: #{simple_model_forward.1} parent=1 // pred_check_branch
      %24 = sbr.rel (0) target = $region25
    $region24: #{simple_model_forward.1} parent=1 // pred_region
      _
    $region25: #{simple_model_forward.1} parent=1 // pred_fallthru
      _
    // Predicated region
    $region26: #{simple_model_forward.1} parent=1 // pred_check
      _
    $region27: #{simple_model_forward.1} parent=1 // pred_check_branch
      %26 = sbr.rel (0) target = $region29
    $region28: #{simple_model_forward.1} parent=1 // pred_region
      _
    $region29: #{simple_model_forward.1} parent=1 // pred_fallthru
      _
    %v27 = vld [vmem:[%s0] sm:$0xff]
    %v28 = vld [vmem:[%s1] sm:$0x1f]
    %v29 = vld [vmem:[%s2] sm:$0x1]
    %v31 = vlaneseq
    %v32 = vshrl.u32 %v31, 7
    %v33 = vsub.s32 0, %v32
    %v34 = vrot.slane %v29, %v33
    %vm36 = vcmask 39936
    %v38 = vsel %vm36, %v27, 0
    %vm40 = vcmask 1044480
    %v42 = vsel %vm40, %v28, 0
    %44 = vmatprep.subr.mxu0 0.0
    %v45 = vand.u32 %v42, 4294901760
    %46 = vmatpush1.msra.mxu0 %v45
    %47 = vmatprep.subr.mxu0 0.0
    %48 = vmatpush1.msra.mxu0 0.0
    %49 = vmatprep.subr.mxu0 0.0
    %50 = vmatpush1.msra.mxu0 0.0
    %51 = vmatprep.subr.mxu0 0.0
    %52 = vmatpush1.msra.mxu0 0.0
    %53 = vmatprep.subr.mxu0 0.0
    %54 = vmatpush1.msra.mxu0 0.0
    %55 = vmatprep.subr.mxu0 0.0
    %56 = vmatpush1.msra.mxu0 0.0
    %57 = vmatprep.subr.mxu0 0.0
    %58 = vmatpush1.msra.mxu0 0.0
    %59 = vmatprep.subr.mxu0 0.0
    %60 = vmatpush1.msra.mxu0 0.0
    %61 = vmatprep.subr.mxu0 0.0
    %62 = vmatpush1.msra.mxu0 0.0
    %63 = vmatprep.subr.mxu0 0.0
    %64 = vmatpush1.msra.mxu0 0.0
    %65 = vmatprep.subr.mxu0 0.0
    %66 = vmatpush1.msra.mxu0 0.0
    %67 = vmatprep.subr.mxu0 0.0
    %68 = vmatpush1.msra.mxu0 0.0
    %69 = vmatprep.subr.mxu0 0.0
    %70 = vmatpush1.msra.mxu0 0.0
    %71 = vmatprep.subr.mxu0 0.0
    %72 = vmatpush1.msra.mxu0 0.0
    %73 = vmatprep.subr.mxu0 0.0
    %74 = vmatpush1.msra.mxu0 0.0
    %75 = vmatprep.subr.mxu0 0.0
    %76 = vmatpush1.msra.mxu0 0.0
    %77 = vmatprep.subr.mxu0 0.0
    %78 = vmatpush1.msra.mxu0 0.0
    %79 = vmatprep.subr.mxu0 0.0
    %80 = vmatpush1.msra.mxu0 0.0
    %81 = vmatprep.subr.mxu0 0.0
    %82 = vmatpush1.msra.mxu0 0.0
    %83 = vmatprep.subr.mxu0 0.0
    %84 = vmatpush1.msra.mxu0 0.0
    %85 = vmatprep.subr.mxu0 0.0
    %86 = vmatpush1.msra.mxu0 0.0
    %87 = vmatprep.subr.mxu0 0.0
    %88 = vmatpush1.msra.mxu0 0.0
    %89 = vmatprep.subr.mxu0 0.0
    %90 = vmatpush1.msra.mxu0 0.0
    %91 = vmatprep.subr.mxu0 0.0
    %92 = vmatpush1.msra.mxu0 0.0
    %93 = vmatprep.subr.mxu0 0.0
    %94 = vmatpush1.msra.mxu0 0.0
    %95 = vmatprep.subr.mxu0 0.0
    %96 = vmatpush1.msra.mxu0 0.0
    %97 = vmatprep.subr.mxu0 0.0
    %98 = vmatpush1.msra.mxu0 0.0
    %99 = vmatprep.subr.mxu0 0.0
    %100 = vmatpush1.msra.mxu0 0.0
    %101 = vmatprep.subr.mxu0 0.0
    %102 = vmatpush1.msra.mxu0 0.0
    %103 = vmatprep.subr.mxu0 0.0
    %104 = vmatpush1.msra.mxu0 0.0
    %105 = vmatprep.subr.mxu0 0.0
    %106 = vmatpush1.msra.mxu0 0.0
    %107 = vmatprep.subr.mxu0 0.0
    %108 = vmatpush1.msra.mxu0 0.0
    %109 = vmatprep.mubr.f32.mxu0 0.0
    %v110 = vand.u32 %v38, 4294901760
    %v111 = vsub.f32 %v38, %v110
    %v112 = vand.u32 %v111, 4294901760
    %v113 = vsub.f32 %v111, %v112
    %v114 = vand.u32 %v113, 4294901760
    %115 = vmatmul.mubr.f32.gmra.mrb[0].mxu0 %v114
    %v116 = vpop.f32.mrb[0].mxu0
    %v117 = vadd.f32 %v34, %v116
    %v118 = vpop.f32.mrb[0].mxu0
    %119 = vdwg.mxu0
    %120 = vmatprep.subr.mxu0 0.0
    %v121 = vand.u32 %v42, 4294901760
    %v122 = vsub.f32 %v42, %v121
    %v123 = vand.u32 %v122, 4294901760
    %v124 = vsub.f32 %v122, %v123
    %v125 = vand.u32 %v124, 4294901760
    %126 = vmatpush1.msra.mxu0 %v125
    %127 = vmatprep.subr.mxu0 0.0
    %128 = vmatpush1.msra.mxu0 0.0
    %129 = vmatprep.subr.mxu0 0.0
    %130 = vmatpush1.msra.mxu0 0.0
    %131 = vmatprep.subr.mxu0 0.0
    %132 = vmatpush1.msra.mxu0 0.0
    %133 = vmatprep.subr.mxu0 0.0
    %134 = vmatpush1.msra.mxu0 0.0
    %135 = vmatprep.subr.mxu0 0.0
    %136 = vmatpush1.msra.mxu0 0.0
    %137 = vmatprep.subr.mxu0 0.0
    %138 = vmatpush1.msra.mxu0 0.0
    %139 = vmatprep.subr.mxu0 0.0
    %140 = vmatpush1.msra.mxu0 0.0
    %141 = vmatprep.subr.mxu0 0.0
    %142 = vmatpush1.msra.mxu0 0.0
    %143 = vmatprep.subr.mxu0 0.0
    %144 = vmatpush1.msra.mxu0 0.0
    %145 = vmatprep.subr.mxu0 0.0
    %146 = vmatpush1.msra.mxu0 0.0
    %147 = vmatprep.subr.mxu0 0.0
    %148 = vmatpush1.msra.mxu0 0.0
    %149 = vmatprep.subr.mxu0 0.0
    %150 = vmatpush1.msra.mxu0 0.0
    %151 = vmatprep.subr.mxu0 0.0
    %152 = vmatpush1.msra.mxu0 0.0
    %153 = vmatprep.subr.mxu0 0.0
    %154 = vmatpush1.msra.mxu0 0.0
    %155 = vmatprep.subr.mxu0 0.0
    %156 = vmatpush1.msra.mxu0 0.0
    %157 = vmatprep.subr.mxu0 0.0
    %158 = vmatpush1.msra.mxu0 0.0
    %159 = vmatprep.subr.mxu0 0.0
    %160 = vmatpush1.msra.mxu0 0.0
    %161 = vmatprep.subr.mxu0 0.0
    %162 = vmatpush1.msra.mxu0 0.0
    %163 = vmatprep.subr.mxu0 0.0
    %164 = vmatpush1.msra.mxu0 0.0
    %165 = vmatprep.subr.mxu0 0.0
    %166 = vmatpush1.msra.mxu0 0.0
    %167 = vmatprep.subr.mxu0 0.0
    %168 = vmatpush1.msra.mxu0 0.0
    %169 = vmatprep.subr.mxu0 0.0
    %170 = vmatpush1.msra.mxu0 0.0
    %171 = vmatprep.subr.mxu0 0.0
    %172 = vmatpush1.msra.mxu0 0.0
    %173 = vmatprep.subr.mxu0 0.0
    %174 = vmatpush1.msra.mxu0 0.0
    %175 = vmatprep.subr.mxu0 0.0
    %176 = vmatpush1.msra.mxu0 0.0
    %177 = vmatprep.subr.mxu0 0.0
    %178 = vmatpush1.msra.mxu0 0.0
    %179 = vmatprep.subr.mxu0 0.0
    %180 = vmatpush1.msra.mxu0 0.0
    %181 = vmatprep.subr.mxu0 0.0
    %182 = vmatpush1.msra.mxu0 0.0
    %183 = vmatprep.subr.mxu0 0.0
    %184 = vmatpush1.msra.mxu0 0.0
    %185 = vmatprep.subr.mxu0 0.0
    %186 = vmatpush1.msra.mxu0 0.0
    %187 = vmatprep.subr.mxu0 0.0
    %188 = vmatpush1.msra.mxu0 0.0
    %189 = vmatprep.mubr.f32.mxu0 0.0
    %v190 = vand.u32 %v38, 4294901760
    %191 = vmatmul.mubr.f32.gmra.mrb[0].mxu0 %v190
    %v192 = vpop.f32.mrb[0].mxu0
    %v193 = vadd.f32 %v117, %v192
    %v194 = vpop.f32.mrb[0].mxu0
    %195 = vdwg.mxu0
    %196 = vmatprep.subr.mxu0 0.0
    %v197 = vand.u32 %v42, 4294901760
    %v198 = vsub.f32 %v42, %v197
    %199 = vmatpush1.msra.mxu0 %v198
    %200 = vmatprep.subr.mxu0 0.0
    %201 = vmatpush1.msra.mxu0 0.0
    %202 = vmatprep.subr.mxu0 0.0
    %203 = vmatpush1.msra.mxu0 0.0
    %204 = vmatprep.subr.mxu0 0.0
    %205 = vmatpush1.msra.mxu0 0.0
    %206 = vmatprep.subr.mxu0 0.0
    %207 = vmatpush1.msra.mxu0 0.0
    %208 = vmatprep.subr.mxu0 0.0
    %209 = vmatpush1.msra.mxu0 0.0
    %210 = vmatprep.subr.mxu0 0.0
    %211 = vmatpush1.msra.mxu0 0.0
    %212 = vmatprep.subr.mxu0 0.0
    %213 = vmatpush1.msra.mxu0 0.0
    %214 = vmatprep.subr.mxu0 0.0
    %215 = vmatpush1.msra.mxu0 0.0
    %216 = vmatprep.subr.mxu0 0.0
    %217 = vmatpush1.msra.mxu0 0.0
    %218 = vmatprep.subr.mxu0 0.0
    %219 = vmatpush1.msra.mxu0 0.0
    %220 = vmatprep.subr.mxu0 0.0
    %221 = vmatpush1.msra.mxu0 0.0
    %222 = vmatprep.subr.mxu0 0.0
    %223 = vmatpush1.msra.mxu0 0.0
    %224 = vmatprep.subr.mxu0 0.0
    %225 = vmatpush1.msra.mxu0 0.0
    %226 = vmatprep.subr.mxu0 0.0
    %227 = vmatpush1.msra.mxu0 0.0
    %228 = vmatprep.subr.mxu0 0.0
    %229 = vmatpush1.msra.mxu0 0.0
    %230 = vmatprep.subr.mxu0 0.0
    %231 = vmatpush1.msra.mxu0 0.0
    %232 = vmatprep.subr.mxu0 0.0
    %233 = vmatpush1.msra.mxu0 0.0
    %234 = vmatprep.subr.mxu0 0.0
    %235 = vmatpush1.msra.mxu0 0.0
    %236 = vmatprep.subr.mxu0 0.0
    %237 = vmatpush1.msra.mxu0 0.0
    %238 = vmatprep.subr.mxu0 0.0
    %239 = vmatpush1.msra.mxu0 0.0
    %240 = vmatprep.subr.mxu0 0.0
    %241 = vmatpush1.msra.mxu0 0.0
    %242 = vmatprep.subr.mxu0 0.0
    %243 = vmatpush1.msra.mxu0 0.0
    %244 = vmatprep.subr.mxu0 0.0
    %245 = vmatpush1.msra.mxu0 0.0
    %246 = vmatprep.subr.mxu0 0.0
    %247 = vmatpush1.msra.mxu0 0.0
    %248 = vmatprep.subr.mxu0 0.0
    %249 = vmatpush1.msra.mxu0 0.0
    %250 = vmatprep.subr.mxu0 0.0
    %251 = vmatpush1.msra.mxu0 0.0
    %252 = vmatprep.subr.mxu0 0.0
    %253 = vmatpush1.msra.mxu0 0.0
    %254 = vmatprep.subr.mxu0 0.0
    %255 = vmatpush1.msra.mxu0 0.0
    %256 = vmatprep.subr.mxu0 0.0
    %257 = vmatpush1.msra.mxu0 0.0
    %258 = vmatprep.subr.mxu0 0.0
    %259 = vmatpush1.msra.mxu0 0.0
    %260 = vmatprep.subr.mxu0 0.0
    %261 = vmatpush1.msra.mxu0 0.0
    %262 = vmatprep.mubr.f32.mxu0 0.0
    %v263 = vand.u32 %v38, 4294901760
    %v264 = vsub.f32 %v38, %v263
    %265 = vmatmul.mubr.f32.gmra.mrb[0].mxu0 %v264
    %v266 = vpop.f32.mrb[0].mxu0
    %v267 = vadd.f32 %v193, %v266
    %v268 = vpop.f32.mrb[0].mxu0
    %269 = vdwg.mxu0
    %270 = vmatprep.subr.mxu0 0.0
    %v271 = vand.u32 %v42, 4294901760
    %272 = vmatpush1.msra.mxu0 %v271
    %273 = vmatprep.subr.mxu0 0.0
    %274 = vmatpush1.msra.mxu0 0.0
    %275 = vmatprep.subr.mxu0 0.0
    %276 = vmatpush1.msra.mxu0 0.0
    %277 = vmatprep.subr.mxu0 0.0
    %278 = vmatpush1.msra.mxu0 0.0
    %279 = vmatprep.subr.mxu0 0.0
    %280 = vmatpush1.msra.mxu0 0.0
    %281 = vmatprep.subr.mxu0 0.0
    %282 = vmatpush1.msra.mxu0 0.0
    %283 = vmatprep.subr.mxu0 0.0
    %284 = vmatpush1.msra.mxu0 0.0
    %285 = vmatprep.subr.mxu0 0.0
    %286 = vmatpush1.msra.mxu0 0.0
    %287 = vmatprep.subr.mxu0 0.0
    %288 = vmatpush1.msra.mxu0 0.0
    %289 = vmatprep.subr.mxu0 0.0
    %290 = vmatpush1.msra.mxu0 0.0
    %291 = vmatprep.subr.mxu0 0.0
    %292 = vmatpush1.msra.mxu0 0.0
    %293 = vmatprep.subr.mxu0 0.0
    %294 = vmatpush1.msra.mxu0 0.0
    %295 = vmatprep.subr.mxu0 0.0
    %296 = vmatpush1.msra.mxu0 0.0
    %297 = vmatprep.subr.mxu0 0.0
    %298 = vmatpush1.msra.mxu0 0.0
    %299 = vmatprep.subr.mxu0 0.0
    %300 = vmatpush1.msra.mxu0 0.0
    %301 = vmatprep.subr.mxu0 0.0
    %302 = vmatpush1.msra.mxu0 0.0
    %303 = vmatprep.subr.mxu0 0.0
    %304 = vmatpush1.msra.mxu0 0.0
    %305 = vmatprep.subr.mxu0 0.0
    %306 = vmatpush1.msra.mxu0 0.0
    %307 = vmatprep.subr.mxu0 0.0
    %308 = vmatpush1.msra.mxu0 0.0
    %309 = vmatprep.subr.mxu0 0.0
    %310 = vmatpush1.msra.mxu0 0.0
    %311 = vmatprep.subr.mxu0 0.0
    %312 = vmatpush1.msra.mxu0 0.0
    %313 = vmatprep.subr.mxu0 0.0
    %314 = vmatpush1.msra.mxu0 0.0
    %315 = vmatprep.subr.mxu0 0.0
    %316 = vmatpush1.msra.mxu0 0.0
    %317 = vmatprep.subr.mxu0 0.0
    %318 = vmatpush1.msra.mxu0 0.0
    %319 = vmatprep.subr.mxu0 0.0
    %320 = vmatpush1.msra.mxu0 0.0
    %321 = vmatprep.subr.mxu0 0.0
    %322 = vmatpush1.msra.mxu0 0.0
    %323 = vmatprep.subr.mxu0 0.0
    %324 = vmatpush1.msra.mxu0 0.0
    %325 = vmatprep.subr.mxu0 0.0
    %326 = vmatpush1.msra.mxu0 0.0
    %327 = vmatprep.subr.mxu0 0.0
    %328 = vmatpush1.msra.mxu0 0.0
    %329 = vmatprep.subr.mxu0 0.0
    %330 = vmatpush1.msra.mxu0 0.0
    %331 = vmatprep.subr.mxu0 0.0
    %332 = vmatpush1.msra.mxu0 0.0
    %333 = vmatprep.subr.mxu0 0.0
    %334 = vmatpush1.msra.mxu0 0.0
    %335 = vmatprep.mubr.f32.mxu0 0.0
    %v336 = vand.u32 %v38, 4294901760
    %v337 = vsub.f32 %v38, %v336
    %v338 = vand.u32 %v337, 4294901760
    %339 = vmatmul.mubr.f32.gmra.mrb[0].mxu0 %v338
    %v340 = vpop.f32.mrb[0].mxu0
    %v341 = vadd.f32 %v267, %v340
    %v342 = vpop.f32.mrb[0].mxu0
    %343 = vdwg.mxu0
    %344 = vmatprep.subr.mxu0 0.0
    %v345 = vand.u32 %v42, 4294901760
    %v346 = vsub.f32 %v42, %v345
    %v347 = vand.u32 %v346, 4294901760
    %348 = vmatpush1.msra.mxu0 %v347
    %349 = vmatprep.subr.mxu0 0.0
    %350 = vmatpush1.msra.mxu0 0.0
    %351 = vmatprep.subr.mxu0 0.0
    %352 = vmatpush1.msra.mxu0 0.0
    %353 = vmatprep.subr.mxu0 0.0
    %354 = vmatpush1.msra.mxu0 0.0
    %355 = vmatprep.subr.mxu0 0.0
    %356 = vmatpush1.msra.mxu0 0.0
    %357 = vmatprep.subr.mxu0 0.0
    %358 = vmatpush1.msra.mxu0 0.0
    %359 = vmatprep.subr.mxu0 0.0
    %360 = vmatpush1.msra.mxu0 0.0
    %361 = vmatprep.subr.mxu0 0.0
    %362 = vmatpush1.msra.mxu0 0.0
    %363 = vmatprep.subr.mxu0 0.0
    %364 = vmatpush1.msra.mxu0 0.0
    %365 = vmatprep.subr.mxu0 0.0
    %366 = vmatpush1.msra.mxu0 0.0
    %367 = vmatprep.subr.mxu0 0.0
    %368 = vmatpush1.msra.mxu0 0.0
    %369 = vmatprep.subr.mxu0 0.0
    %370 = vmatpush1.msra.mxu0 0.0
    %371 = vmatprep.subr.mxu0 0.0
    %372 = vmatpush1.msra.mxu0 0.0
    %373 = vmatprep.subr.mxu0 0.0
    %374 = vmatpush1.msra.mxu0 0.0
    %375 = vmatprep.subr.mxu0 0.0
    %376 = vmatpush1.msra.mxu0 0.0
    %377 = vmatprep.subr.mxu0 0.0
    %378 = vmatpush1.msra.mxu0 0.0
    %379 = vmatprep.subr.mxu0 0.0
    %380 = vmatpush1.msra.mxu0 0.0
    %381 = vmatprep.subr.mxu0 0.0
    %382 = vmatpush1.msra.mxu0 0.0
    %383 = vmatprep.subr.mxu0 0.0
    %384 = vmatpush1.msra.mxu0 0.0
    %385 = vmatprep.subr.mxu0 0.0
    %386 = vmatpush1.msra.mxu0 0.0
    %387 = vmatprep.subr.mxu0 0.0
    %388 = vmatpush1.msra.mxu0 0.0
    %389 = vmatprep.subr.mxu0 0.0
    %390 = vmatpush1.msra.mxu0 0.0
    %391 = vmatprep.subr.mxu0 0.0
    %392 = vmatpush1.msra.mxu0 0.0
    %393 = vmatprep.subr.mxu0 0.0
    %394 = vmatpush1.msra.mxu0 0.0
    %395 = vmatprep.subr.mxu0 0.0
    %396 = vmatpush1.msra.mxu0 0.0
    %397 = vmatprep.subr.mxu0 0.0
    %398 = vmatpush1.msra.mxu0 0.0
    %399 = vmatprep.subr.mxu0 0.0
    %400 = vmatpush1.msra.mxu0 0.0
    %401 = vmatprep.subr.mxu0 0.0
    %402 = vmatpush1.msra.mxu0 0.0
    %403 = vmatprep.subr.mxu0 0.0
    %404 = vmatpush1.msra.mxu0 0.0
    %405 = vmatprep.subr.mxu0 0.0
    %406 = vmatpush1.msra.mxu0 0.0
    %407 = vmatprep.subr.mxu0 0.0
    %408 = vmatpush1.msra.mxu0 0.0
    %409 = vmatprep.subr.mxu0 0.0
    %410 = vmatpush1.msra.mxu0 0.0
    %411 = vmatprep.mubr.f32.mxu0 0.0
    %v412 = vand.u32 %v38, 4294901760
    %413 = vmatmul.mubr.f32.gmra.mrb[0].mxu0 %v412
    %v414 = vpop.f32.mrb[0].mxu0
    %v415 = vadd.f32 %v341, %v414
    %v416 = vpop.f32.mrb[0].mxu0
    %417 = vdwg.mxu0
    %418 = vmatprep.subr.mxu0 0.0
    %v419 = vand.u32 %v42, 4294901760
    %420 = vmatpush1.msra.mxu0 %v419
    %421 = vmatprep.subr.mxu0 0.0
    %422 = vmatpush1.msra.mxu0 0.0
    %423 = vmatprep.subr.mxu0 0.0
    %424 = vmatpush1.msra.mxu0 0.0
    %425 = vmatprep.subr.mxu0 0.0
    %426 = vmatpush1.msra.mxu0 0.0
    %427 = vmatprep.subr.mxu0 0.0
    %428 = vmatpush1.msra.mxu0 0.0
    %429 = vmatprep.subr.mxu0 0.0
    %430 = vmatpush1.msra.mxu0 0.0
    %431 = vmatprep.subr.mxu0 0.0
    %432 = vmatpush1.msra.mxu0 0.0
    %433 = vmatprep.subr.mxu0 0.0
    %434 = vmatpush1.msra.mxu0 0.0
    %435 = vmatprep.subr.mxu0 0.0
    %436 = vmatpush1.msra.mxu0 0.0
    %437 = vmatprep.subr.mxu0 0.0
    %438 = vmatpush1.msra.mxu0 0.0
    %439 = vmatprep.subr.mxu0 0.0
    %440 = vmatpush1.msra.mxu0 0.0
    %441 = vmatprep.subr.mxu0 0.0
    %442 = vmatpush1.msra.mxu0 0.0
    %443 = vmatprep.subr.mxu0 0.0
    %444 = vmatpush1.msra.mxu0 0.0
    %445 = vmatprep.subr.mxu0 0.0
    %446 = vmatpush1.msra.mxu0 0.0
    %447 = vmatprep.subr.mxu0 0.0
    %448 = vmatpush1.msra.mxu0 0.0
    %449 = vmatprep.subr.mxu0 0.0
    %450 = vmatpush1.msra.mxu0 0.0
    %451 = vmatprep.subr.mxu0 0.0
    %452 = vmatpush1.msra.mxu0 0.0
    %453 = vmatprep.subr.mxu0 0.0
    %454 = vmatpush1.msra.mxu0 0.0
    %455 = vmatprep.subr.mxu0 0.0
    %456 = vmatpush1.msra.mxu0 0.0
    %457 = vmatprep.subr.mxu0 0.0
    %458 = vmatpush1.msra.mxu0 0.0
    %459 = vmatprep.subr.mxu0 0.0
    %460 = vmatpush1.msra.mxu0 0.0
    %461 = vmatprep.subr.mxu0 0.0
    %462 = vmatpush1.msra.mxu0 0.0
    %463 = vmatprep.subr.mxu0 0.0
    %464 = vmatpush1.msra.mxu0 0.0
    %465 = vmatprep.subr.mxu0 0.0
    %466 = vmatpush1.msra.mxu0 0.0
    %467 = vmatprep.subr.mxu0 0.0
    %468 = vmatpush1.msra.mxu0 0.0
    %469 = vmatprep.subr.mxu0 0.0
    %470 = vmatpush1.msra.mxu0 0.0
    %471 = vmatprep.subr.mxu0 0.0
    %472 = vmatpush1.msra.mxu0 0.0
    %473 = vmatprep.subr.mxu0 0.0
    %474 = vmatpush1.msra.mxu0 0.0
    %475 = vmatprep.subr.mxu0 0.0
    %476 = vmatpush1.msra.mxu0 0.0
    %477 = vmatprep.subr.mxu0 0.0
    %478 = vmatpush1.msra.mxu0 0.0
    %479 = vmatprep.subr.mxu0 0.0
    %480 = vmatpush1.msra.mxu0 0.0
    %481 = vmatprep.subr.mxu0 0.0
    %482 = vmatpush1.msra.mxu0 0.0
    %483 = vmatprep.mubr.f32.mxu0 0.0
    %v484 = vand.u32 %v38, 4294901760
    %485 = vmatmul.mubr.f32.gmra.mrb[0].mxu0 %v484
    %v486 = vpop.f32.mrb[0].mxu0
    %v487 = vadd.f32 %v415, %v486
    %v488 = vpop.f32.mrb[0].mxu0
    %489 = vdwg.mxu0
    %v490 = vmax.f32 %v487, 0.0
    %v491 = vld [vmem:[%s3] sm:$0xff]
    %v492 = vld [vmem:[%s4] sm:$0x1]
    %v494 = vlaneseq
    %v495 = vshrl.u32 %v494, 7
    %v496 = vsub.s32 0, %v495
    %v497 = vrot.slane %v492, %v496
    %vm499 = vcmask 64512
    %v501 = vsel %vm499, %v490, 0
    %503 = vmatprep.subr.mxu0 0.0
    %v504 = vand.u32 %v491, 4294901760
    %505 = vmatpush1.msra.mxu0 %v504
    %506 = vmatprep.subr.mxu0 0.0
    %507 = vmatpush1.msra.mxu0 0.0
    %508 = vmatprep.subr.mxu0 0.0
    %509 = vmatpush1.msra.mxu0 0.0
    %510 = vmatprep.subr.mxu0 0.0
    %511 = vmatpush1.msra.mxu0 0.0
    %512 = vmatprep.subr.mxu0 0.0
    %513 = vmatpush1.msra.mxu0 0.0
    %514 = vmatprep.subr.mxu0 0.0
    %515 = vmatpush1.msra.mxu0 0.0
    %516 = vmatprep.subr.mxu0 0.0
    %517 = vmatpush1.msra.mxu0 0.0
    %518 = vmatprep.subr.mxu0 0.0
    %519 = vmatpush1.msra.mxu0 0.0
    %520 = vmatprep.subr.mxu0 0.0
    %521 = vmatpush1.msra.mxu0 0.0
    %522 = vmatprep.subr.mxu0 0.0
    %523 = vmatpush1.msra.mxu0 0.0
    %524 = vmatprep.subr.mxu0 0.0
    %525 = vmatpush1.msra.mxu0 0.0
    %526 = vmatprep.subr.mxu0 0.0
    %527 = vmatpush1.msra.mxu0 0.0
    %528 = vmatprep.subr.mxu0 0.0
    %529 = vmatpush1.msra.mxu0 0.0
    %530 = vmatprep.subr.mxu0 0.0
    %531 = vmatpush1.msra.mxu0 0.0
    %532 = vmatprep.subr.mxu0 0.0
    %533 = vmatpush1.msra.mxu0 0.0
    %534 = vmatprep.subr.mxu0 0.0
    %535 = vmatpush1.msra.mxu0 0.0
    %536 = vmatprep.subr.mxu0 0.0
    %537 = vmatpush1.msra.mxu0 0.0
    %538 = vmatprep.subr.mxu0 0.0
    %539 = vmatpush1.msra.mxu0 0.0
    %540 = vmatprep.subr.mxu0 0.0
    %541 = vmatpush1.msra.mxu0 0.0
    %542 = vmatprep.subr.mxu0 0.0
    %543 = vmatpush1.msra.mxu0 0.0
    %544 = vmatprep.subr.mxu0 0.0
    %545 = vmatpush1.msra.mxu0 0.0
    %546 = vmatprep.subr.mxu0 0.0
    %547 = vmatpush1.msra.mxu0 0.0
    %548 = vmatprep.subr.mxu0 0.0
    %549 = vmatpush1.msra.mxu0 0.0
    %550 = vmatprep.subr.mxu0 0.0
    %551 = vmatpush1.msra.mxu0 0.0
    %552 = vmatprep.subr.mxu0 0.0
    %553 = vmatpush1.msra.mxu0 0.0
    %554 = vmatprep.subr.mxu0 0.0
    %555 = vmatpush1.msra.mxu0 0.0
    %556 = vmatprep.subr.mxu0 0.0
    %557 = vmatpush1.msra.mxu0 0.0
    %558 = vmatprep.subr.mxu0 0.0
    %559 = vmatpush1.msra.mxu0 0.0
    %560 = vmatprep.subr.mxu0 0.0
    %561 = vmatpush1.msra.mxu0 0.0
    %562 = vmatprep.subr.mxu0 0.0
    %563 = vmatpush1.msra.mxu0 0.0
    %564 = vmatprep.subr.mxu0 0.0
    %565 = vmatpush1.msra.mxu0 0.0
    %566 = vmatprep.subr.mxu0 0.0
    %567 = vmatpush1.msra.mxu0 0.0
    %568 = vmatprep.mubr.f32.mxu0 0.0
    %v569 = vand.u32 %v501, 4294901760
    %v570 = vsub.f32 %v501, %v569
    %v571 = vand.u32 %v570, 4294901760
    %v572 = vsub.f32 %v570, %v571
    %v573 = vand.u32 %v572, 4294901760
    %574 = vmatmul.mubr.f32.gmra.mrb[0].mxu0 %v573
    %v575 = vpop.f32.mrb[0].mxu0
    %v576 = vadd.f32 %v497, %v575
    %v577 = vpop.f32.mrb[0].mxu0
    %578 = vdwg.mxu0
    %579 = vmatprep.subr.mxu0 0.0
    %v580 = vand.u32 %v491, 4294901760
    %v581 = vsub.f32 %v491, %v580
    %v582 = vand.u32 %v581, 4294901760
    %v583 = vsub.f32 %v581, %v582
    %v584 = vand.u32 %v583, 4294901760
    %585 = vmatpush1.msra.mxu0 %v584
    %586 = vmatprep.subr.mxu0 0.0
    %587 = vmatpush1.msra.mxu0 0.0
    %588 = vmatprep.subr.mxu0 0.0
    %589 = vmatpush1.msra.mxu0 0.0
    %590 = vmatprep.subr.mxu0 0.0
    %591 = vmatpush1.msra.mxu0 0.0
    %592 = vmatprep.subr.mxu0 0.0
    %593 = vmatpush1.msra.mxu0 0.0
    %594 = vmatprep.subr.mxu0 0.0
    %595 = vmatpush1.msra.mxu0 0.0
    %596 = vmatprep.subr.mxu0 0.0
    %597 = vmatpush1.msra.mxu0 0.0
    %598 = vmatprep.subr.mxu0 0.0
    %599 = vmatpush1.msra.mxu0 0.0
    %600 = vmatprep.subr.mxu0 0.0
    %601 = vmatpush1.msra.mxu0 0.0
    %602 = vmatprep.subr.mxu0 0.0
    %603 = vmatpush1.msra.mxu0 0.0
    %604 = vmatprep.subr.mxu0 0.0
    %605 = vmatpush1.msra.mxu0 0.0
    %606 = vmatprep.subr.mxu0 0.0
    %607 = vmatpush1.msra.mxu0 0.0
    %608 = vmatprep.subr.mxu0 0.0
    %609 = vmatpush1.msra.mxu0 0.0
    %610 = vmatprep.subr.mxu0 0.0
    %611 = vmatpush1.msra.mxu0 0.0
    %612 = vmatprep.subr.mxu0 0.0
    %613 = vmatpush1.msra.mxu0 0.0
    %614 = vmatprep.subr.mxu0 0.0
    %615 = vmatpush1.msra.mxu0 0.0
    %616 = vmatprep.subr.mxu0 0.0
    %617 = vmatpush1.msra.mxu0 0.0
    %618 = vmatprep.subr.mxu0 0.0
    %619 = vmatpush1.msra.mxu0 0.0
    %620 = vmatprep.subr.mxu0 0.0
    %621 = vmatpush1.msra.mxu0 0.0
    %622 = vmatprep.subr.mxu0 0.0
    %623 = vmatpush1.msra.mxu0 0.0
    %624 = vmatprep.subr.mxu0 0.0
    %625 = vmatpush1.msra.mxu0 0.0
    %626 = vmatprep.subr.mxu0 0.0
    %627 = vmatpush1.msra.mxu0 0.0
    %628 = vmatprep.subr.mxu0 0.0
    %629 = vmatpush1.msra.mxu0 0.0
    %630 = vmatprep.subr.mxu0 0.0
    %631 = vmatpush1.msra.mxu0 0.0
    %632 = vmatprep.subr.mxu0 0.0
    %633 = vmatpush1.msra.mxu0 0.0
    %634 = vmatprep.subr.mxu0 0.0
    %635 = vmatpush1.msra.mxu0 0.0
    %636 = vmatprep.subr.mxu0 0.0
    %637 = vmatpush1.msra.mxu0 0.0
    %638 = vmatprep.subr.mxu0 0.0
    %639 = vmatpush1.msra.mxu0 0.0
    %640 = vmatprep.subr.mxu0 0.0
    %641 = vmatpush1.msra.mxu0 0.0
    %642 = vmatprep.subr.mxu0 0.0
    %643 = vmatpush1.msra.mxu0 0.0
    %644 = vmatprep.subr.mxu0 0.0
    %645 = vmatpush1.msra.mxu0 0.0
    %646 = vmatprep.subr.mxu0 0.0
    %647 = vmatpush1.msra.mxu0 0.0
    %648 = vmatprep.mubr.f32.mxu0 0.0
    %v649 = vand.u32 %v501, 4294901760
    %650 = vmatmul.mubr.f32.gmra.mrb[0].mxu0 %v649
    %v651 = vpop.f32.mrb[0].mxu0
    %v652 = vadd.f32 %v576, %v651
    %v653 = vpop.f32.mrb[0].mxu0
    %654 = vdwg.mxu0
    %655 = vmatprep.subr.mxu0 0.0
    %v656 = vand.u32 %v491, 4294901760
    %v657 = vsub.f32 %v491, %v656
    %658 = vmatpush1.msra.mxu0 %v657
    %659 = vmatprep.subr.mxu0 0.0
    %660 = vmatpush1.msra.mxu0 0.0
    %661 = vmatprep.subr.mxu0 0.0
    %662 = vmatpush1.msra.mxu0 0.0
    %663 = vmatprep.subr.mxu0 0.0
    %664 = vmatpush1.msra.mxu0 0.0
    %665 = vmatprep.subr.mxu0 0.0
    %666 = vmatpush1.msra.mxu0 0.0
    %667 = vmatprep.subr.mxu0 0.0
    %668 = vmatpush1.msra.mxu0 0.0
    %669 = vmatprep.subr.mxu0 0.0
    %670 = vmatpush1.msra.mxu0 0.0
    %671 = vmatprep.subr.mxu0 0.0
    %672 = vmatpush1.msra.mxu0 0.0
    %673 = vmatprep.subr.mxu0 0.0
    %674 = vmatpush1.msra.mxu0 0.0
    %675 = vmatprep.subr.mxu0 0.0
    %676 = vmatpush1.msra.mxu0 0.0
    %677 = vmatprep.subr.mxu0 0.0
    %678 = vmatpush1.msra.mxu0 0.0
    %679 = vmatprep.subr.mxu0 0.0
    %680 = vmatpush1.msra.mxu0 0.0
    %681 = vmatprep.subr.mxu0 0.0
    %682 = vmatpush1.msra.mxu0 0.0
    %683 = vmatprep.subr.mxu0 0.0
    %684 = vmatpush1.msra.mxu0 0.0
    %685 = vmatprep.subr.mxu0 0.0
    %686 = vmatpush1.msra.mxu0 0.0
    %687 = vmatprep.subr.mxu0 0.0
    %688 = vmatpush1.msra.mxu0 0.0
    %689 = vmatprep.subr.mxu0 0.0
    %690 = vmatpush1.msra.mxu0 0.0
    %691 = vmatprep.subr.mxu0 0.0
    %692 = vmatpush1.msra.mxu0 0.0
    %693 = vmatprep.subr.mxu0 0.0
    %694 = vmatpush1.msra.mxu0 0.0
    %695 = vmatprep.subr.mxu0 0.0
    %696 = vmatpush1.msra.mxu0 0.0
    %697 = vmatprep.subr.mxu0 0.0
    %698 = vmatpush1.msra.mxu0 0.0
    %699 = vmatprep.subr.mxu0 0.0
    %700 = vmatpush1.msra.mxu0 0.0
    %701 = vmatprep.subr.mxu0 0.0
    %702 = vmatpush1.msra.mxu0 0.0
    %703 = vmatprep.subr.mxu0 0.0
    %704 = vmatpush1.msra.mxu0 0.0
    %705 = vmatprep.subr.mxu0 0.0
    %706 = vmatpush1.msra.mxu0 0.0
    %707 = vmatprep.subr.mxu0 0.0
    %708 = vmatpush1.msra.mxu0 0.0
    %709 = vmatprep.subr.mxu0 0.0
    %710 = vmatpush1.msra.mxu0 0.0
    %711 = vmatprep.subr.mxu0 0.0
    %712 = vmatpush1.msra.mxu0 0.0
    %713 = vmatprep.subr.mxu0 0.0
    %714 = vmatpush1.msra.mxu0 0.0
    %715 = vmatprep.subr.mxu0 0.0
    %716 = vmatpush1.msra.mxu0 0.0
    %717 = vmatprep.subr.mxu0 0.0
    %718 = vmatpush1.msra.mxu0 0.0
    %719 = vmatprep.subr.mxu0 0.0
    %720 = vmatpush1.msra.mxu0 0.0
    %721 = vmatprep.mubr.f32.mxu0 0.0
    %v722 = vand.u32 %v501, 4294901760
    %v723 = vsub.f32 %v501, %v722
    %724 = vmatmul.mubr.f32.gmra.mrb[0].mxu0 %v723
    %v725 = vpop.f32.mrb[0].mxu0
    %v726 = vadd.f32 %v652, %v725
    %v727 = vpop.f32.mrb[0].mxu0
    %728 = vdwg.mxu0
    %729 = vmatprep.subr.mxu0 0.0
    %v730 = vand.u32 %v491, 4294901760
    %731 = vmatpush1.msra.mxu0 %v730
    %732 = vmatprep.subr.mxu0 0.0
    %733 = vmatpush1.msra.mxu0 0.0
    %734 = vmatprep.subr.mxu0 0.0
    %735 = vmatpush1.msra.mxu0 0.0
    %736 = vmatprep.subr.mxu0 0.0
    %737 = vmatpush1.msra.mxu0 0.0
    %738 = vmatprep.subr.mxu0 0.0
    %739 = vmatpush1.msra.mxu0 0.0
    %740 = vmatprep.subr.mxu0 0.0
    %741 = vmatpush1.msra.mxu0 0.0
    %742 = vmatprep.subr.mxu0 0.0
    %743 = vmatpush1.msra.mxu0 0.0
    %744 = vmatprep.subr.mxu0 0.0
    %745 = vmatpush1.msra.mxu0 0.0
    %746 = vmatprep.subr.mxu0 0.0
    %747 = vmatpush1.msra.mxu0 0.0
    %748 = vmatprep.subr.mxu0 0.0
    %749 = vmatpush1.msra.mxu0 0.0
    %750 = vmatprep.subr.mxu0 0.0
    %751 = vmatpush1.msra.mxu0 0.0
    %752 = vmatprep.subr.mxu0 0.0
    %753 = vmatpush1.msra.mxu0 0.0
    %754 = vmatprep.subr.mxu0 0.0
    %755 = vmatpush1.msra.mxu0 0.0
    %756 = vmatprep.subr.mxu0 0.0
    %757 = vmatpush1.msra.mxu0 0.0
    %758 = vmatprep.subr.mxu0 0.0
    %759 = vmatpush1.msra.mxu0 0.0
    %760 = vmatprep.subr.mxu0 0.0
    %761 = vmatpush1.msra.mxu0 0.0
    %762 = vmatprep.subr.mxu0 0.0
    %763 = vmatpush1.msra.mxu0 0.0
    %764 = vmatprep.subr.mxu0 0.0
    %765 = vmatpush1.msra.mxu0 0.0
    %766 = vmatprep.subr.mxu0 0.0
    %767 = vmatpush1.msra.mxu0 0.0
    %768 = vmatprep.subr.mxu0 0.0
    %769 = vmatpush1.msra.mxu0 0.0
    %770 = vmatprep.subr.mxu0 0.0
    %771 = vmatpush1.msra.mxu0 0.0
    %772 = vmatprep.subr.mxu0 0.0
    %773 = vmatpush1.msra.mxu0 0.0
    %774 = vmatprep.subr.mxu0 0.0
    %775 = vmatpush1.msra.mxu0 0.0
    %776 = vmatprep.subr.mxu0 0.0
    %777 = vmatpush1.msra.mxu0 0.0
    %778 = vmatprep.subr.mxu0 0.0
    %779 = vmatpush1.msra.mxu0 0.0
    %780 = vmatprep.subr.mxu0 0.0
    %781 = vmatpush1.msra.mxu0 0.0
    %782 = vmatprep.subr.mxu0 0.0
    %783 = vmatpush1.msra.mxu0 0.0
    %784 = vmatprep.subr.mxu0 0.0
    %785 = vmatpush1.msra.mxu0 0.0
    %786 = vmatprep.subr.mxu0 0.0
    %787 = vmatpush1.msra.mxu0 0.0
    %788 = vmatprep.subr.mxu0 0.0
    %789 = vmatpush1.msra.mxu0 0.0
    %790 = vmatprep.subr.mxu0 0.0
    %791 = vmatpush1.msra.mxu0 0.0
    %792 = vmatprep.subr.mxu0 0.0
    %793 = vmatpush1.msra.mxu0 0.0
    %794 = vmatprep.mubr.f32.mxu0 0.0
    %v795 = vand.u32 %v501, 4294901760
    %v796 = vsub.f32 %v501, %v795
    %v797 = vand.u32 %v796, 4294901760
    %798 = vmatmul.mubr.f32.gmra.mrb[0].mxu0 %v797
    %v799 = vpop.f32.mrb[0].mxu0
    %v800 = vadd.f32 %v726, %v799
    %v801 = vpop.f32.mrb[0].mxu0
    %802 = vdwg.mxu0
    %803 = vmatprep.subr.mxu0 0.0
    %v804 = vand.u32 %v491, 4294901760
    %v805 = vsub.f32 %v491, %v804
    %v806 = vand.u32 %v805, 4294901760
    %807 = vmatpush1.msra.mxu0 %v806
    %808 = vmatprep.subr.mxu0 0.0
    %809 = vmatpush1.msra.mxu0 0.0
    %810 = vmatprep.subr.mxu0 0.0
    %811 = vmatpush1.msra.mxu0 0.0
    %812 = vmatprep.subr.mxu0 0.0
    %813 = vmatpush1.msra.mxu0 0.0
    %814 = vmatprep.subr.mxu0 0.0
    %815 = vmatpush1.msra.mxu0 0.0
    %816 = vmatprep.subr.mxu0 0.0
    %817 = vmatpush1.msra.mxu0 0.0
    %818 = vmatprep.subr.mxu0 0.0
    %819 = vmatpush1.msra.mxu0 0.0
    %820 = vmatprep.subr.mxu0 0.0
    %821 = vmatpush1.msra.mxu0 0.0
    %822 = vmatprep.subr.mxu0 0.0
    %823 = vmatpush1.msra.mxu0 0.0
    %824 = vmatprep.subr.mxu0 0.0
    %825 = vmatpush1.msra.mxu0 0.0
    %826 = vmatprep.subr.mxu0 0.0
    %827 = vmatpush1.msra.mxu0 0.0
    %828 = vmatprep.subr.mxu0 0.0
    %829 = vmatpush1.msra.mxu0 0.0
    %830 = vmatprep.subr.mxu0 0.0
    %831 = vmatpush1.msra.mxu0 0.0
    %832 = vmatprep.subr.mxu0 0.0
    %833 = vmatpush1.msra.mxu0 0.0
    %834 = vmatprep.subr.mxu0 0.0
    %835 = vmatpush1.msra.mxu0 0.0
    %836 = vmatprep.subr.mxu0 0.0
    %837 = vmatpush1.msra.mxu0 0.0
    %838 = vmatprep.subr.mxu0 0.0
    %839 = vmatpush1.msra.mxu0 0.0
    %840 = vmatprep.subr.mxu0 0.0
    %841 = vmatpush1.msra.mxu0 0.0
    %842 = vmatprep.subr.mxu0 0.0
    %843 = vmatpush1.msra.mxu0 0.0
    %844 = vmatprep.subr.mxu0 0.0
    %845 = vmatpush1.msra.mxu0 0.0
    %846 = vmatprep.subr.mxu0 0.0
    %847 = vmatpush1.msra.mxu0 0.0
    %848 = vmatprep.subr.mxu0 0.0
    %849 = vmatpush1.msra.mxu0 0.0
    %850 = vmatprep.subr.mxu0 0.0
    %851 = vmatpush1.msra.mxu0 0.0
    %852 = vmatprep.subr.mxu0 0.0
    %853 = vmatpush1.msra.mxu0 0.0
    %854 = vmatprep.subr.mxu0 0.0
    %855 = vmatpush1.msra.mxu0 0.0
    %856 = vmatprep.subr.mxu0 0.0
    %857 = vmatpush1.msra.mxu0 0.0
    %858 = vmatprep.subr.mxu0 0.0
    %859 = vmatpush1.msra.mxu0 0.0
    %860 = vmatprep.subr.mxu0 0.0
    %861 = vmatpush1.msra.mxu0 0.0
    %862 = vmatprep.subr.mxu0 0.0
    %863 = vmatpush1.msra.mxu0 0.0
    %864 = vmatprep.subr.mxu0 0.0
    %865 = vmatpush1.msra.mxu0 0.0
    %866 = vmatprep.subr.mxu0 0.0
    %867 = vmatpush1.msra.mxu0 0.0
    %868 = vmatprep.subr.mxu0 0.0
    %869 = vmatpush1.msra.mxu0 0.0
    %870 = vmatprep.mubr.f32.mxu0 0.0
    %v871 = vand.u32 %v501, 4294901760
    %872 = vmatmul.mubr.f32.gmra.mrb[0].mxu0 %v871
    %v873 = vpop.f32.mrb[0].mxu0
    %v874 = vadd.f32 %v800, %v873
    %v875 = vpop.f32.mrb[0].mxu0
    %876 = vdwg.mxu0
    %877 = vmatprep.subr.mxu0 0.0
    %v878 = vand.u32 %v491, 4294901760
    %879 = vmatpush1.msra.mxu0 %v878
    %880 = vmatprep.subr.mxu0 0.0
    %881 = vmatpush1.msra.mxu0 0.0
    %882 = vmatprep.subr.mxu0 0.0
    %883 = vmatpush1.msra.mxu0 0.0
    %884 = vmatprep.subr.mxu0 0.0
    %885 = vmatpush1.msra.mxu0 0.0
    %886 = vmatprep.subr.mxu0 0.0
    %887 = vmatpush1.msra.mxu0 0.0
    %888 = vmatprep.subr.mxu0 0.0
    %889 = vmatpush1.msra.mxu0 0.0
    %890 = vmatprep.subr.mxu0 0.0
    %891 = vmatpush1.msra.mxu0 0.0
    %892 = vmatprep.subr.mxu0 0.0
    %893 = vmatpush1.msra.mxu0 0.0
    %894 = vmatprep.subr.mxu0 0.0
    %895 = vmatpush1.msra.mxu0 0.0
    %896 = vmatprep.subr.mxu0 0.0
    %897 = vmatpush1.msra.mxu0 0.0
    %898 = vmatprep.subr.mxu0 0.0
    %899 = vmatpush1.msra.mxu0 0.0
    %900 = vmatprep.subr.mxu0 0.0
    %901 = vmatpush1.msra.mxu0 0.0
    %902 = vmatprep.subr.mxu0 0.0
    %903 = vmatpush1.msra.mxu0 0.0
    %904 = vmatprep.subr.mxu0 0.0
    %905 = vmatpush1.msra.mxu0 0.0
    %906 = vmatprep.subr.mxu0 0.0
    %907 = vmatpush1.msra.mxu0 0.0
    %908 = vmatprep.subr.mxu0 0.0
    %909 = vmatpush1.msra.mxu0 0.0
    %910 = vmatprep.subr.mxu0 0.0
    %911 = vmatpush1.msra.mxu0 0.0
    %912 = vmatprep.subr.mxu0 0.0
    %913 = vmatpush1.msra.mxu0 0.0
    %914 = vmatprep.subr.mxu0 0.0
    %915 = vmatpush1.msra.mxu0 0.0
    %916 = vmatprep.subr.mxu0 0.0
    %917 = vmatpush1.msra.mxu0 0.0
    %918 = vmatprep.subr.mxu0 0.0
    %919 = vmatpush1.msra.mxu0 0.0
    %920 = vmatprep.subr.mxu0 0.0
    %921 = vmatpush1.msra.mxu0 0.0
    %922 = vmatprep.subr.mxu0 0.0
    %923 = vmatpush1.msra.mxu0 0.0
    %924 = vmatprep.subr.mxu0 0.0
    %925 = vmatpush1.msra.mxu0 0.0
    %926 = vmatprep.subr.mxu0 0.0
    %927 = vmatpush1.msra.mxu0 0.0
    %928 = vmatprep.subr.mxu0 0.0
    %929 = vmatpush1.msra.mxu0 0.0
    %930 = vmatprep.subr.mxu0 0.0
    %931 = vmatpush1.msra.mxu0 0.0
    %932 = vmatprep.subr.mxu0 0.0
    %933 = vmatpush1.msra.mxu0 0.0
    %934 = vmatprep.subr.mxu0 0.0
    %935 = vmatpush1.msra.mxu0 0.0
    %936 = vmatprep.subr.mxu0 0.0
    %937 = vmatpush1.msra.mxu0 0.0
    %938 = vmatprep.subr.mxu0 0.0
    %939 = vmatpush1.msra.mxu0 0.0
    %940 = vmatprep.subr.mxu0 0.0
    %941 = vmatpush1.msra.mxu0 0.0
    %942 = vmatprep.mubr.f32.mxu0 0.0
    %v943 = vand.u32 %v501, 4294901760
    %944 = vmatmul.mubr.f32.gmra.mrb[0].mxu0 %v943
    %v945 = vpop.f32.mrb[0].mxu0
    %v946 = vadd.f32 %v874, %v945
    %v947 = vpop.f32.mrb[0].mxu0
    %948 = vdwg.mxu0
    %v949 = vmax.f32 %v946, 0.0
    %v950 = vld [vmem:[%s5] sm:$0xf]
    %v951 = vld [vmem:[%s6] sm:$0x1]
    %v953 = vlaneseq
    %v954 = vshrl.u32 %v953, 7
    %v955 = vsub.s32 0, %v954
    %v956 = vrot.slane %v951, %v955
    %vm958 = vcmask 31744
    %v960 = vsel %vm958, %v949, 0
    %vm962 = vcmask 1043456
    %v964 = vsel %vm962, %v950, 0
    %966 = vmatprep.subr.mxu0 0.0
    %v967 = vand.u32 %v964, 4294901760
    %968 = vmatpush1.msra.mxu0 %v967
    %969 = vmatprep.subr.mxu0 0.0
    %970 = vmatpush1.msra.mxu0 0.0
    %971 = vmatprep.subr.mxu0 0.0
    %972 = vmatpush1.msra.mxu0 0.0
    %973 = vmatprep.subr.mxu0 0.0
    %974 = vmatpush1.msra.mxu0 0.0
    %975 = vmatprep.subr.mxu0 0.0
    %976 = vmatpush1.msra.mxu0 0.0
    %977 = vmatprep.subr.mxu0 0.0
    %978 = vmatpush1.msra.mxu0 0.0
    %979 = vmatprep.subr.mxu0 0.0
    %980 = vmatpush1.msra.mxu0 0.0
    %981 = vmatprep.subr.mxu0 0.0
    %982 = vmatpush1.msra.mxu0 0.0
    %983 = vmatprep.subr.mxu0 0.0
    %984 = vmatpush1.msra.mxu0 0.0
    %985 = vmatprep.subr.mxu0 0.0
    %986 = vmatpush1.msra.mxu0 0.0
    %987 = vmatprep.subr.mxu0 0.0
    %988 = vmatpush1.msra.mxu0 0.0
    %989 = vmatprep.subr.mxu0 0.0
    %990 = vmatpush1.msra.mxu0 0.0
    %991 = vmatprep.subr.mxu0 0.0
    %992 = vmatpush1.msra.mxu0 0.0
    %993 = vmatprep.subr.mxu0 0.0
    %994 = vmatpush1.msra.mxu0 0.0
    %995 = vmatprep.subr.mxu0 0.0
    %996 = vmatpush1.msra.mxu0 0.0
    %997 = vmatprep.subr.mxu0 0.0
    %998 = vmatpush1.msra.mxu0 0.0
    %999 = vmatprep.subr.mxu0 0.0
    %1000 = vmatpush1.msra.mxu0 0.0
    %1001 = vmatprep.subr.mxu0 0.0
    %1002 = vmatpush1.msra.mxu0 0.0
    %1003 = vmatprep.subr.mxu0 0.0
    %1004 = vmatpush1.msra.mxu0 0.0
    %1005 = vmatprep.subr.mxu0 0.0
    %1006 = vmatpush1.msra.mxu0 0.0
    %1007 = vmatprep.subr.mxu0 0.0
    %1008 = vmatpush1.msra.mxu0 0.0
    %1009 = vmatprep.subr.mxu0 0.0
    %1010 = vmatpush1.msra.mxu0 0.0
    %1011 = vmatprep.subr.mxu0 0.0
    %1012 = vmatpush1.msra.mxu0 0.0
    %1013 = vmatprep.subr.mxu0 0.0
    %1014 = vmatpush1.msra.mxu0 0.0
    %1015 = vmatprep.subr.mxu0 0.0
    %1016 = vmatpush1.msra.mxu0 0.0
    %1017 = vmatprep.subr.mxu0 0.0
    %1018 = vmatpush1.msra.mxu0 0.0
    %1019 = vmatprep.subr.mxu0 0.0
    %1020 = vmatpush1.msra.mxu0 0.0
    %1021 = vmatprep.subr.mxu0 0.0
    %1022 = vmatpush1.msra.mxu0 0.0
    %1023 = vmatprep.subr.mxu0 0.0
    %1024 = vmatpush1.msra.mxu0 0.0
    %1025 = vmatprep.subr.mxu0 0.0
    %1026 = vmatpush1.msra.mxu0 0.0
    %1027 = vmatprep.subr.mxu0 0.0
    %1028 = vmatpush1.msra.mxu0 0.0
    %1029 = vmatprep.subr.mxu0 0.0
    %1030 = vmatpush1.msra.mxu0 0.0
    %1031 = vmatprep.mubr.f32.mxu0 0.0
    %v1032 = vand.u32 %v960, 4294901760
    %v1033 = vsub.f32 %v960, %v1032
    %v1034 = vand.u32 %v1033, 4294901760
    %v1035 = vsub.f32 %v1033, %v1034
    %v1036 = vand.u32 %v1035, 4294901760
    %1037 = vmatmul.mubr.f32.gmra.mrb[0].mxu0 %v1036
    %v1038 = vpop.f32.mrb[0].mxu0
    %v1039 = vadd.f32 %v956, %v1038
    %v1040 = vpop.f32.mrb[0].mxu0
    %1041 = vdwg.mxu0
    %1042 = vmatprep.subr.mxu0 0.0
    %v1043 = vand.u32 %v964, 4294901760
    %v1044 = vsub.f32 %v964, %v1043
    %v1045 = vand.u32 %v1044, 4294901760
    %v1046 = vsub.f32 %v1044, %v1045
    %v1047 = vand.u32 %v1046, 4294901760
    %1048 = vmatpush1.msra.mxu0 %v1047
    %1049 = vmatprep.subr.mxu0 0.0
    %1050 = vmatpush1.msra.mxu0 0.0
    %1051 = vmatprep.subr.mxu0 0.0
    %1052 = vmatpush1.msra.mxu0 0.0
    %1053 = vmatprep.subr.mxu0 0.0
    %1054 = vmatpush1.msra.mxu0 0.0
    %1055 = vmatprep.subr.mxu0 0.0
    %1056 = vmatpush1.msra.mxu0 0.0
    %1057 = vmatprep.subr.mxu0 0.0
    %1058 = vmatpush1.msra.mxu0 0.0
    %1059 = vmatprep.subr.mxu0 0.0
    %1060 = vmatpush1.msra.mxu0 0.0
    %1061 = vmatprep.subr.mxu0 0.0
    %1062 = vmatpush1.msra.mxu0 0.0
    %1063 = vmatprep.subr.mxu0 0.0
    %1064 = vmatpush1.msra.mxu0 0.0
    %1065 = vmatprep.subr.mxu0 0.0
    %1066 = vmatpush1.msra.mxu0 0.0
    %1067 = vmatprep.subr.mxu0 0.0
    %1068 = vmatpush1.msra.mxu0 0.0
    %1069 = vmatprep.subr.mxu0 0.0
    %1070 = vmatpush1.msra.mxu0 0.0
    %1071 = vmatprep.subr.mxu0 0.0
    %1072 = vmatpush1.msra.mxu0 0.0
    %1073 = vmatprep.subr.mxu0 0.0
    %1074 = vmatpush1.msra.mxu0 0.0
    %1075 = vmatprep.subr.mxu0 0.0
    %1076 = vmatpush1.msra.mxu0 0.0
    %1077 = vmatprep.subr.mxu0 0.0
    %1078 = vmatpush1.msra.mxu0 0.0
    %1079 = vmatprep.subr.mxu0 0.0
    %1080 = vmatpush1.msra.mxu0 0.0
    %1081 = vmatprep.subr.mxu0 0.0
    %1082 = vmatpush1.msra.mxu0 0.0
    %1083 = vmatprep.subr.mxu0 0.0
    %1084 = vmatpush1.msra.mxu0 0.0
    %1085 = vmatprep.subr.mxu0 0.0
    %1086 = vmatpush1.msra.mxu0 0.0
    %1087 = vmatprep.subr.mxu0 0.0
    %1088 = vmatpush1.msra.mxu0 0.0
    %1089 = vmatprep.subr.mxu0 0.0
    %1090 = vmatpush1.msra.mxu0 0.0
    %1091 = vmatprep.subr.mxu0 0.0
    %1092 = vmatpush1.msra.mxu0 0.0
    %1093 = vmatprep.subr.mxu0 0.0
    %1094 = vmatpush1.msra.mxu0 0.0
    %1095 = vmatprep.subr.mxu0 0.0
    %1096 = vmatpush1.msra.mxu0 0.0
    %1097 = vmatprep.subr.mxu0 0.0
    %1098 = vmatpush1.msra.mxu0 0.0
    %1099 = vmatprep.subr.mxu0 0.0
    %1100 = vmatpush1.msra.mxu0 0.0
    %1101 = vmatprep.subr.mxu0 0.0
    %1102 = vmatpush1.msra.mxu0 0.0
    %1103 = vmatprep.subr.mxu0 0.0
    %1104 = vmatpush1.msra.mxu0 0.0
    %1105 = vmatprep.subr.mxu0 0.0
    %1106 = vmatpush1.msra.mxu0 0.0
    %1107 = vmatprep.subr.mxu0 0.0
    %1108 = vmatpush1.msra.mxu0 0.0
    %1109 = vmatprep.subr.mxu0 0.0
    %1110 = vmatpush1.msra.mxu0 0.0
    %1111 = vmatprep.mubr.f32.mxu0 0.0
    %v1112 = vand.u32 %v960, 4294901760
    %1113 = vmatmul.mubr.f32.gmra.mrb[0].mxu0 %v1112
    %v1114 = vpop.f32.mrb[0].mxu0
    %v1115 = vadd.f32 %v1039, %v1114
    %v1116 = vpop.f32.mrb[0].mxu0
    %1117 = vdwg.mxu0
    %1118 = vmatprep.subr.mxu0 0.0
    %v1119 = vand.u32 %v964, 4294901760
    %v1120 = vsub.f32 %v964, %v1119
    %1121 = vmatpush1.msra.mxu0 %v1120
    %1122 = vmatprep.subr.mxu0 0.0
    %1123 = vmatpush1.msra.mxu0 0.0
    %1124 = vmatprep.subr.mxu0 0.0
    %1125 = vmatpush1.msra.mxu0 0.0
    %1126 = vmatprep.subr.mxu0 0.0
    %1127 = vmatpush1.msra.mxu0 0.0
    %1128 = vmatprep.subr.mxu0 0.0
    %1129 = vmatpush1.msra.mxu0 0.0
    %1130 = vmatprep.subr.mxu0 0.0
    %1131 = vmatpush1.msra.mxu0 0.0
    %1132 = vmatprep.subr.mxu0 0.0
    %1133 = vmatpush1.msra.mxu0 0.0
    %1134 = vmatprep.subr.mxu0 0.0
    %1135 = vmatpush1.msra.mxu0 0.0
    %1136 = vmatprep.subr.mxu0 0.0
    %1137 = vmatpush1.msra.mxu0 0.0
    %1138 = vmatprep.subr.mxu0 0.0
    %1139 = vmatpush1.msra.mxu0 0.0
    %1140 = vmatprep.subr.mxu0 0.0
    %1141 = vmatpush1.msra.mxu0 0.0
    %1142 = vmatprep.subr.mxu0 0.0
    %1143 = vmatpush1.msra.mxu0 0.0
    %1144 = vmatprep.subr.mxu0 0.0
    %1145 = vmatpush1.msra.mxu0 0.0
    %1146 = vmatprep.subr.mxu0 0.0
    %1147 = vmatpush1.msra.mxu0 0.0
    %1148 = vmatprep.subr.mxu0 0.0
    %1149 = vmatpush1.msra.mxu0 0.0
    %1150 = vmatprep.subr.mxu0 0.0
    %1151 = vmatpush1.msra.mxu0 0.0
    %1152 = vmatprep.subr.mxu0 0.0
    %1153 = vmatpush1.msra.mxu0 0.0
    %1154 = vmatprep.subr.mxu0 0.0
    %1155 = vmatpush1.msra.mxu0 0.0
    %1156 = vmatprep.subr.mxu0 0.0
    %1157 = vmatpush1.msra.mxu0 0.0
    %1158 = vmatprep.subr.mxu0 0.0
    %1159 = vmatpush1.msra.mxu0 0.0
    %1160 = vmatprep.subr.mxu0 0.0
    %1161 = vmatpush1.msra.mxu0 0.0
    %1162 = vmatprep.subr.mxu0 0.0
    %1163 = vmatpush1.msra.mxu0 0.0
    %1164 = vmatprep.subr.mxu0 0.0
    %1165 = vmatpush1.msra.mxu0 0.0
    %1166 = vmatprep.subr.mxu0 0.0
    %1167 = vmatpush1.msra.mxu0 0.0
    %1168 = vmatprep.subr.mxu0 0.0
    %1169 = vmatpush1.msra.mxu0 0.0
    %1170 = vmatprep.subr.mxu0 0.0
    %1171 = vmatpush1.msra.mxu0 0.0
    %1172 = vmatprep.subr.mxu0 0.0
    %1173 = vmatpush1.msra.mxu0 0.0
    %1174 = vmatprep.subr.mxu0 0.0
    %1175 = vmatpush1.msra.mxu0 0.0
    %1176 = vmatprep.subr.mxu0 0.0
    %1177 = vmatpush1.msra.mxu0 0.0
    %1178 = vmatprep.subr.mxu0 0.0
    %1179 = vmatpush1.msra.mxu0 0.0
    %1180 = vmatprep.subr.mxu0 0.0
    %1181 = vmatpush1.msra.mxu0 0.0
    %1182 = vmatprep.subr.mxu0 0.0
    %1183 = vmatpush1.msra.mxu0 0.0
    %1184 = vmatprep.mubr.f32.mxu0 0.0
    %v1185 = vand.u32 %v960, 4294901760
    %v1186 = vsub.f32 %v960, %v1185
    %1187 = vmatmul.mubr.f32.gmra.mrb[0].mxu0 %v1186
    %v1188 = vpop.f32.mrb[0].mxu0
    %v1189 = vadd.f32 %v1115, %v1188
    %v1190 = vpop.f32.mrb[0].mxu0
    %1191 = vdwg.mxu0
    %1192 = vmatprep.subr.mxu0 0.0
    %v1193 = vand.u32 %v964, 4294901760
    %1194 = vmatpush1.msra.mxu0 %v1193
    %1195 = vmatprep.subr.mxu0 0.0
    %1196 = vmatpush1.msra.mxu0 0.0
    %1197 = vmatprep.subr.mxu0 0.0
    %1198 = vmatpush1.msra.mxu0 0.0
    %1199 = vmatprep.subr.mxu0 0.0
    %1200 = vmatpush1.msra.mxu0 0.0
    %1201 = vmatprep.subr.mxu0 0.0
    %1202 = vmatpush1.msra.mxu0 0.0
    %1203 = vmatprep.subr.mxu0 0.0
    %1204 = vmatpush1.msra.mxu0 0.0
    %1205 = vmatprep.subr.mxu0 0.0
    %1206 = vmatpush1.msra.mxu0 0.0
    %1207 = vmatprep.subr.mxu0 0.0
    %1208 = vmatpush1.msra.mxu0 0.0
    %1209 = vmatprep.subr.mxu0 0.0
    %1210 = vmatpush1.msra.mxu0 0.0
    %1211 = vmatprep.subr.mxu0 0.0
    %1212 = vmatpush1.msra.mxu0 0.0
    %1213 = vmatprep.subr.mxu0 0.0
    %1214 = vmatpush1.msra.mxu0 0.0
    %1215 = vmatprep.subr.mxu0 0.0
    %1216 = vmatpush1.msra.mxu0 0.0
    %1217 = vmatprep.subr.mxu0 0.0
    %1218 = vmatpush1.msra.mxu0 0.0
    %1219 = vmatprep.subr.mxu0 0.0
    %1220 = vmatpush1.msra.mxu0 0.0
    %1221 = vmatprep.subr.mxu0 0.0
    %1222 = vmatpush1.msra.mxu0 0.0
    %1223 = vmatprep.subr.mxu0 0.0
    %1224 = vmatpush1.msra.mxu0 0.0
    %1225 = vmatprep.subr.mxu0 0.0
    %1226 = vmatpush1.msra.mxu0 0.0
    %1227 = vmatprep.subr.mxu0 0.0
    %1228 = vmatpush1.msra.mxu0 0.0
    %1229 = vmatprep.subr.mxu0 0.0
    %1230 = vmatpush1.msra.mxu0 0.0
    %1231 = vmatprep.subr.mxu0 0.0
    %1232 = vmatpush1.msra.mxu0 0.0
    %1233 = vmatprep.subr.mxu0 0.0
    %1234 = vmatpush1.msra.mxu0 0.0
    %1235 = vmatprep.subr.mxu0 0.0
    %1236 = vmatpush1.msra.mxu0 0.0
    %1237 = vmatprep.subr.mxu0 0.0
    %1238 = vmatpush1.msra.mxu0 0.0
    %1239 = vmatprep.subr.mxu0 0.0
    %1240 = vmatpush1.msra.mxu0 0.0
    %1241 = vmatprep.subr.mxu0 0.0
    %1242 = vmatpush1.msra.mxu0 0.0
    %1243 = vmatprep.subr.mxu0 0.0
    %1244 = vmatpush1.msra.mxu0 0.0
    %1245 = vmatprep.subr.mxu0 0.0
    %1246 = vmatpush1.msra.mxu0 0.0
    %1247 = vmatprep.subr.mxu0 0.0
    %1248 = vmatpush1.msra.mxu0 0.0
    %1249 = vmatprep.subr.mxu0 0.0
    %1250 = vmatpush1.msra.mxu0 0.0
    %1251 = vmatprep.subr.mxu0 0.0
    %1252 = vmatpush1.msra.mxu0 0.0
    %1253 = vmatprep.subr.mxu0 0.0
    %1254 = vmatpush1.msra.mxu0 0.0
    %1255 = vmatprep.subr.mxu0 0.0
    %1256 = vmatpush1.msra.mxu0 0.0
    %1257 = vmatprep.mubr.f32.mxu0 0.0
    %v1258 = vand.u32 %v960, 4294901760
    %v1259 = vsub.f32 %v960, %v1258
    %v1260 = vand.u32 %v1259, 4294901760
    %1261 = vmatmul.mubr.f32.gmra.mrb[0].mxu0 %v1260
    %v1262 = vpop.f32.mrb[0].mxu0
    %v1263 = vadd.f32 %v1189, %v1262
    %v1264 = vpop.f32.mrb[0].mxu0
    %1265 = vdwg.mxu0
    %1266 = vmatprep.subr.mxu0 0.0
    %v1267 = vand.u32 %v964, 4294901760
    %v1268 = vsub.f32 %v964, %v1267
    %v1269 = vand.u32 %v1268, 4294901760
    %1270 = vmatpush1.msra.mxu0 %v1269
    %1271 = vmatprep.subr.mxu0 0.0
    %1272 = vmatpush1.msra.mxu0 0.0
    %1273 = vmatprep.subr.mxu0 0.0
    %1274 = vmatpush1.msra.mxu0 0.0
    %1275 = vmatprep.subr.mxu0 0.0
    %1276 = vmatpush1.msra.mxu0 0.0
    %1277 = vmatprep.subr.mxu0 0.0
    %1278 = vmatpush1.msra.mxu0 0.0
    %1279 = vmatprep.subr.mxu0 0.0
    %1280 = vmatpush1.msra.mxu0 0.0
    %1281 = vmatprep.subr.mxu0 0.0
    %1282 = vmatpush1.msra.mxu0 0.0
    %1283 = vmatprep.subr.mxu0 0.0
    %1284 = vmatpush1.msra.mxu0 0.0
    %1285 = vmatprep.subr.mxu0 0.0
    %1286 = vmatpush1.msra.mxu0 0.0
    %1287 = vmatprep.subr.mxu0 0.0
    %1288 = vmatpush1.msra.mxu0 0.0
    %1289 = vmatprep.subr.mxu0 0.0
    %1290 = vmatpush1.msra.mxu0 0.0
    %1291 = vmatprep.subr.mxu0 0.0
    %1292 = vmatpush1.msra.mxu0 0.0
    %1293 = vmatprep.subr.mxu0 0.0
    %1294 = vmatpush1.msra.mxu0 0.0
    %1295 = vmatprep.subr.mxu0 0.0
    %1296 = vmatpush1.msra.mxu0 0.0
    %1297 = vmatprep.subr.mxu0 0.0
    %1298 = vmatpush1.msra.mxu0 0.0
    %1299 = vmatprep.subr.mxu0 0.0
    %1300 = vmatpush1.msra.mxu0 0.0
    %1301 = vmatprep.subr.mxu0 0.0
    %1302 = vmatpush1.msra.mxu0 0.0
    %1303 = vmatprep.subr.mxu0 0.0
    %1304 = vmatpush1.msra.mxu0 0.0
    %1305 = vmatprep.subr.mxu0 0.0
    %1306 = vmatpush1.msra.mxu0 0.0
    %1307 = vmatprep.subr.mxu0 0.0
    %1308 = vmatpush1.msra.mxu0 0.0
    %1309 = vmatprep.subr.mxu0 0.0
    %1310 = vmatpush1.msra.mxu0 0.0
    %1311 = vmatprep.subr.mxu0 0.0
    %1312 = vmatpush1.msra.mxu0 0.0
    %1313 = vmatprep.subr.mxu0 0.0
    %1314 = vmatpush1.msra.mxu0 0.0
    %1315 = vmatprep.subr.mxu0 0.0
    %1316 = vmatpush1.msra.mxu0 0.0
    %1317 = vmatprep.subr.mxu0 0.0
    %1318 = vmatpush1.msra.mxu0 0.0
    %1319 = vmatprep.subr.mxu0 0.0
    %1320 = vmatpush1.msra.mxu0 0.0
    %1321 = vmatprep.subr.mxu0 0.0
    %1322 = vmatpush1.msra.mxu0 0.0
    %1323 = vmatprep.subr.mxu0 0.0
    %1324 = vmatpush1.msra.mxu0 0.0
    %1325 = vmatprep.subr.mxu0 0.0
    %1326 = vmatpush1.msra.mxu0 0.0
    %1327 = vmatprep.subr.mxu0 0.0
    %1328 = vmatpush1.msra.mxu0 0.0
    %1329 = vmatprep.subr.mxu0 0.0
    %1330 = vmatpush1.msra.mxu0 0.0
    %1331 = vmatprep.subr.mxu0 0.0
    %1332 = vmatpush1.msra.mxu0 0.0
    %1333 = vmatprep.mubr.f32.mxu0 0.0
    %v1334 = vand.u32 %v960, 4294901760
    %1335 = vmatmul.mubr.f32.gmra.mrb[0].mxu0 %v1334
    %v1336 = vpop.f32.mrb[0].mxu0
    %v1337 = vadd.f32 %v1263, %v1336
    %v1338 = vpop.f32.mrb[0].mxu0
    %1339 = vdwg.mxu0
    %1340 = vmatprep.subr.mxu0 0.0
    %v1341 = vand.u32 %v964, 4294901760
    %1342 = vmatpush1.msra.mxu0 %v1341
    %1343 = vmatprep.subr.mxu0 0.0
    %1344 = vmatpush1.msra.mxu0 0.0
    %1345 = vmatprep.subr.mxu0 0.0
    %1346 = vmatpush1.msra.mxu0 0.0
    %1347 = vmatprep.subr.mxu0 0.0
    %1348 = vmatpush1.msra.mxu0 0.0
    %1349 = vmatprep.subr.mxu0 0.0
    %1350 = vmatpush1.msra.mxu0 0.0
    %1351 = vmatprep.subr.mxu0 0.0
    %1352 = vmatpush1.msra.mxu0 0.0
    %1353 = vmatprep.subr.mxu0 0.0
    %1354 = vmatpush1.msra.mxu0 0.0
    %1355 = vmatprep.subr.mxu0 0.0
    %1356 = vmatpush1.msra.mxu0 0.0
    %1357 = vmatprep.subr.mxu0 0.0
    %1358 = vmatpush1.msra.mxu0 0.0
    %1359 = vmatprep.subr.mxu0 0.0
    %1360 = vmatpush1.msra.mxu0 0.0
    %1361 = vmatprep.subr.mxu0 0.0
    %1362 = vmatpush1.msra.mxu0 0.0
    %1363 = vmatprep.subr.mxu0 0.0
    %1364 = vmatpush1.msra.mxu0 0.0
    %1365 = vmatprep.subr.mxu0 0.0
    %1366 = vmatpush1.msra.mxu0 0.0
    %1367 = vmatprep.subr.mxu0 0.0
    %1368 = vmatpush1.msra.mxu0 0.0
    %1369 = vmatprep.subr.mxu0 0.0
    %1370 = vmatpush1.msra.mxu0 0.0
    %1371 = vmatprep.subr.mxu0 0.0
    %1372 = vmatpush1.msra.mxu0 0.0
    %1373 = vmatprep.subr.mxu0 0.0
    %1374 = vmatpush1.msra.mxu0 0.0
    %1375 = vmatprep.subr.mxu0 0.0
    %1376 = vmatpush1.msra.mxu0 0.0
    %1377 = vmatprep.subr.mxu0 0.0
    %1378 = vmatpush1.msra.mxu0 0.0
    %1379 = vmatprep.subr.mxu0 0.0
    %1380 = vmatpush1.msra.mxu0 0.0
    %1381 = vmatprep.subr.mxu0 0.0
    %1382 = vmatpush1.msra.mxu0 0.0
    %1383 = vmatprep.subr.mxu0 0.0
    %1384 = vmatpush1.msra.mxu0 0.0
    %1385 = vmatprep.subr.mxu0 0.0
    %1386 = vmatpush1.msra.mxu0 0.0
    %1387 = vmatprep.subr.mxu0 0.0
    %1388 = vmatpush1.msra.mxu0 0.0
    %1389 = vmatprep.subr.mxu0 0.0
    %1390 = vmatpush1.msra.mxu0 0.0
    %1391 = vmatprep.subr.mxu0 0.0
    %1392 = vmatpush1.msra.mxu0 0.0
    %1393 = vmatprep.subr.mxu0 0.0
    %1394 = vmatpush1.msra.mxu0 0.0
    %1395 = vmatprep.subr.mxu0 0.0
    %1396 = vmatpush1.msra.mxu0 0.0
    %1397 = vmatprep.subr.mxu0 0.0
    %1398 = vmatpush1.msra.mxu0 0.0
    %1399 = vmatprep.subr.mxu0 0.0
    %1400 = vmatpush1.msra.mxu0 0.0
    %1401 = vmatprep.subr.mxu0 0.0
    %1402 = vmatpush1.msra.mxu0 0.0
    %1403 = vmatprep.subr.mxu0 0.0
    %1404 = vmatpush1.msra.mxu0 0.0
    %1405 = vmatprep.mubr.f32.mxu0 0.0
    %v1406 = vand.u32 %v960, 4294901760
    %1407 = vmatmul.mubr.f32.gmra.mrb[0].mxu0 %v1406
    %v1408 = vpop.f32.mrb[0].mxu0
    %v1409 = vadd.f32 %v1337, %v1408
    %v1410 = vpop.f32.mrb[0].mxu0
    %1411 = vdwg.mxu0
    %v1412 = vmax.f32 %v1409, 0.0
    %vm1413 = vcmask 97280
    %1414 = vst.msk [vmem:[#allocation2] sm:$0xff] %vm1413, %v1412
    // Predicated region
    $region30: #{simple_model_forward.1} parent=1 // pred_check
      _
    $region31: #{simple_model_forward.1} parent=1 // pred_check_branch
      %1416 = sbr.rel (0) target = $region33
    $region32: #{simple_model_forward.1} parent=1 // pred_region
      %s1418 = ssub.s32 128, 128
      %1419 = vsyncadd [#allocation3], %s1418
      %s1421 = sshll.u32 [#allocation2], 4
      %s1422 = int_to_ptr.vmem [resolvable:$true] %s1421
      %1424 = dma.vmem_to_hbm [thread:$0]  %s1422, 128, %s7, [#allocation3]
    $region33: #{simple_model_forward.1} parent=1 // pred_fallthru
      _
    // Predicated region
    $region34: #{simple_model_forward.1} parent=1 // pred_check
      _
    $region35: #{simple_model_forward.1} parent=1 // pred_check_branch
      %1426 = sbr.rel (0) target = $region37
    $region36: #{simple_model_forward.1} parent=1 // pred_region
      %1427 = dma.done [#allocation3], 128
    $region37: #{simple_model_forward.1} parent=1 // pred_fallthru
      _
    %1428 = vsyncpa [#allocation3], 1

</llo_original>
